<compile_context>
chip_gen: v6e
topology: v6e:2x2x1
jax: 0.10.0
libtpu: 0.0.40
codegen_flags: <defaults>
</compile_context>

<pallas_src>
import functools

import jax
import jax.numpy as jnp
from jax.experimental import pallas as pl
from jax.experimental.pallas import tpu as pltpu

LANE = 128      # TPU lane width
SUBLANE = 8     # TPU sublane count


def _round_up(x, m):
    return ((x + m - 1) // m) * m


def dueling_q_kernel(x_ref, slab_ref, out_ref, *, s_pad, width, batch, action_size):
    """Single-block dueling Q forward.

    x_ref   : [B_pad, S_pad]  states (f32, batch zero-padded to a multiple of 8)
    slab_ref: [S_pad + 2*W + 8, W] packed parameters (W = width, lane-dense):
                rows [0, S_pad)          : w1   (real block at [:S, :H])
                rows [S_pad, S_pad+W)    : w2   (real block at [:H, :H])
                rows [S_pad+W, S_pad+2W) : head (adv in cols 0..A-1, value in col W-1)
                rows [S_pad+2W, +8)      : biases (row0=b1, row1=b2, row2=head bias)
    out_ref : [B_pad, W] lane-dense output slab; real Q-values are columns 0..A-1.
    """
    w = width

    w1 = slab_ref[0:s_pad, :]                         # [S_pad, W]
    w2 = slab_ref[s_pad:s_pad + w, :]                 # [W, W]
    wh = slab_ref[s_pad + w:s_pad + 2 * w, :]         # [W, W]

    bias_base = s_pad + 2 * w
    btile = slab_ref[bias_base:bias_base + SUBLANE, :]   # one (8,128)-aligned tile
    b1 = btile[0:1, :].astype(jnp.float32)            # [1, W]
    b2 = btile[1:2, :].astype(jnp.float32)            # [1, W]
    bh = btile[2:3, :].astype(jnp.float32)            # [1, W]

    dot_dtype = w1.dtype
    x = x_ref[...].astype(dot_dtype)                  # [B_pad, S_pad]

    # hidden_fc1 + ReLU, hidden_fc2 + ReLU (full 128-lane dense thanks to padding).
    h1 = jnp.maximum(
        jnp.dot(x, w1, preferred_element_type=jnp.float32) + b1, 0.0)
    h2 = jnp.maximum(
        jnp.dot(h1.astype(dot_dtype), w2, preferred_element_type=jnp.float32) + b2, 0.0)

    # Fused value|advantage head: one MXU matmul.  Columns 0..A-1 = advantage,
    # column W-1 = value, every other column is exactly zero (weights & bias).
    head = jnp.dot(h2.astype(dot_dtype), wh, preferred_element_type=jnp.float32) + bh

    value = head[:, w - 1:w]                          # [B_pad, 1]

    # Global scalar mean over the *real* advantage entries (torch .mean() with
    # no dim => scalar over batch x actions).  Padded head columns are exactly
    # zero, so sum(valid rows) - sum(value lane) == sum of real advantages.
    valid = head[:batch, :]
    adv_sum = jnp.sum(valid) - jnp.sum(valid[:, w - 1:w])
    adv_mean = adv_sum / float(batch * action_size)

    # q = value - (advantage - mean).  Stored lane-dense across all W lanes;
    # padded / value lanes hold junk and are discarded by the wrapper slice.
    out_ref[...] = (value - head + adv_mean).astype(out_ref.dtype)


def pack_params(params, weight_dtype=jnp.float32):
    """One-time parameter packing into a single lane-dense slab (outside hot path)."""
    state_size, hidden = params["w1"].shape
    action_size = params["wa"].shape[1]

    width = _round_up(max(action_size + 1, hidden), LANE)   # 128 for H=64, A<=127
    s_pad = _round_up(state_size, SUBLANE)

    rows = s_pad + 2 * width + SUBLANE
    slab = jnp.zeros((rows, width), jnp.float32)

    # w1: [state_size, hidden] -> rows [0, s_pad)
    slab = slab.at[:state_size, :hidden].set(params["w1"])
    # w2: [hidden, hidden] -> rows [s_pad, s_pad + width)
    slab = slab.at[s_pad:s_pad + hidden, :hidden].set(params["w2"])
    # fused head: advantage in cols 0..A-1, value in last lane.
    hb = s_pad + width
    slab = slab.at[hb:hb + hidden, :action_size].set(params["wa"])
    slab = slab.at[hb:hb + hidden, width - 1:width].set(params["wv"])
    # biases (rows beyond the 3 used stay zero for (8,128) alignment).
    bb = s_pad + 2 * width
    slab = slab.at[bb, :hidden].set(params["b1"][0])
    slab = slab.at[bb + 1, :hidden].set(params["b2"][0])
    slab = slab.at[bb + 2, :action_size].set(params["ba"][0])
    slab = slab.at[bb + 2, width - 1].set(params["bv"][0, 0])

    return {
        "slab": slab.astype(weight_dtype),
        "action_size": action_size,
        "state_size": state_size,
        "width": width,
        "s_pad": s_pad,
    }


def dueling_q_forward(state, packed):
    """state: [B, state_size] f32; packed: output of pack_params."""
    b, s = state.shape
    action_size = packed["action_size"]
    width = packed["width"]
    s_pad = packed["s_pad"]
    b_pad = _round_up(max(b, 1), SUBLANE)

    x = state
    if (b_pad, s_pad) != (b, s):
        # Zero-pad batch (sublane hygiene) and state dim (slab row alignment).
        x = jnp.pad(state, ((0, b_pad - b), (0, s_pad - s)))

    vmem = pl.BlockSpec(memory_space=pltpu.VMEM)
    out_slab = pl.pallas_call(
        functools.partial(dueling_q_kernel, s_pad=s_pad, width=width,
                          batch=b, action_size=action_size),
        out_shape=jax.ShapeDtypeStruct((b_pad, width), jnp.float32),
        in_specs=[vmem, vmem],
        out_specs=vmem,
    )(x, packed["slab"])

    # Real Q-values are the first `action_size` lanes (offset-0, lane-aligned slice).
    return out_slab[:b, :action_size]


def init_params(key, state_size, action_size, hidden=64):
    """nn.Linear-style init: U(-1/sqrt(fan_in), 1/sqrt(fan_in)), weights as [in, out]."""
    def linear(k, fan_in, fan_out):
        kw, kb = jax.random.split(k)
        bound = 1.0 / jnp.sqrt(jnp.float32(fan_in))
        w = jax.random.uniform(kw, (fan_in, fan_out), jnp.float32, -bound, bound)
        b = jax.random.uniform(kb, (1, fan_out), jnp.float32, -bound, bound)
        return w, b

    k1, k2, k3, k4 = jax.random.split(key, 4)
    w1, b1 = linear(k1, state_size, hidden)
    w2, b2 = linear(k2, hidden, hidden)
    wv, bv = linear(k3, hidden, 1)
    wa, ba = linear(k4, hidden, action_size)
    return {"w1": w1, "b1": b1, "w2": w2, "b2": b2,
            "wv": wv, "bv": bv, "wa": wa, "ba": ba}


def reference_forward(state, p):
    """Pure-JAX reference matching the PyTorch forward (q = value - (adv - mean(adv)))."""
    h1 = jnp.maximum(state @ p["w1"] + p["b1"], 0.0)
    h2 = jnp.maximum(h1 @ p["w2"] + p["b2"], 0.0)
    value = h2 @ p["wv"] + p["bv"]
    adv = h2 @ p["wa"] + p["ba"]
    delta = adv - jnp.mean(adv)          # global scalar mean, as in the torch module
    return value - delta


if __name__ == "__main__":
    key = jax.random.PRNGKey(0)
    k_params, k_state = jax.random.split(key)

    batch = 2
    state_size = 16
    action_size = 8

    params = init_params(k_params, state_size, action_size)
    state = jax.random.normal(k_state, (batch, state_size), jnp.float32)

    packed = pack_params(params)
    q_out = dueling_q_forward(state, packed)
    q_out = jax.block_until_ready(q_out)

    q_ref = reference_forward(state, params)
    assert q_out.shape == (batch, action_size)
    assert jnp.allclose(q_out, q_ref, atol=1e-5, rtol=1e-5)

    print("KERNEL_OK")
</pallas_src>

<mosaic_0001>
module attributes {stable_mosaic.version = 11 : i64} {
  func.func @dueling_q_kernel(%arg0: memref<8x16xf32, #tpu.memory_space<vmem>>, %arg1: memref<280x128xf32, #tpu.memory_space<vmem>>, %arg2: memref<8x128xf32, #tpu.memory_space<vmem>>) attributes {dimension_semantics = [], scalar_prefetch = 0 : i64, scratch_operands = 0 : i64, tpu.core_type = #tpu.core_type<tc>} {
    %c0 = arith.constant 0 : index
    %c0_0 = arith.constant 0 : index
    %0 = vector.load %arg1[%c0, %c0_0] : memref<280x128xf32, #tpu.memory_space<vmem>>, vector<16x128xf32>
    %c16 = arith.constant 16 : index
    %c0_1 = arith.constant 0 : index
    %1 = vector.load %arg1[%c16, %c0_1] : memref<280x128xf32, #tpu.memory_space<vmem>>, vector<128x128xf32>
    %c144 = arith.constant 144 : index
    %c0_2 = arith.constant 0 : index
    %2 = vector.load %arg1[%c144, %c0_2] : memref<280x128xf32, #tpu.memory_space<vmem>>, vector<128x128xf32>
    %c272 = arith.constant 272 : index
    %c0_3 = arith.constant 0 : index
    %3 = vector.load %arg1[%c272, %c0_3] : memref<280x128xf32, #tpu.memory_space<vmem>>, vector<8x128xf32>
    %4 = vector.extract_strided_slice %3 {offsets = [0, 0], sizes = [1, 128], strides = [1, 1]} : vector<8x128xf32> to vector<1x128xf32>
    %5 = vector.extract_strided_slice %3 {offsets = [1, 0], sizes = [1, 128], strides = [1, 1]} : vector<8x128xf32> to vector<1x128xf32>
    %6 = vector.extract_strided_slice %3 {offsets = [2, 0], sizes = [1, 128], strides = [1, 1]} : vector<8x128xf32> to vector<1x128xf32>
    %c0_4 = arith.constant 0 : index
    %c0_5 = arith.constant 0 : index
    %7 = vector.load %arg0[%c0_4, %c0_5] : memref<8x16xf32, #tpu.memory_space<vmem>>, vector<8x16xf32>
    %cst = arith.constant dense<0.000000e+00> : vector<8x128xf32>
    %8 = tpu.matmul %7, %0, %cst {dimension_numbers = #tpu.dot_dimension_numbers<[1], [0], [0], [1], [0, 0, 1, 1], [], []>} : vector<8x16xf32>, vector<16x128xf32>, vector<8x128xf32> -> vector<8x128xf32>
    %9 = vector.broadcast %4 : vector<1x128xf32> to vector<8x128xf32>
    %10 = arith.addf %8, %9 : vector<8x128xf32>
    %cst_6 = arith.constant 0.000000e+00 : f32
    %11 = vector.broadcast %cst_6 : f32 to vector<8x128xf32>
    %12 = arith.maximumf %10, %11 : vector<8x128xf32>
    %cst_7 = arith.constant dense<0.000000e+00> : vector<8x128xf32>
    %13 = tpu.matmul %12, %1, %cst_7 {dimension_numbers = #tpu.dot_dimension_numbers<[1], [0], [0], [1], [0, 0, 1, 1], [], []>} : vector<8x128xf32>, vector<128x128xf32>, vector<8x128xf32> -> vector<8x128xf32>
    %14 = vector.broadcast %5 : vector<1x128xf32> to vector<8x128xf32>
    %15 = arith.addf %13, %14 : vector<8x128xf32>
    %cst_8 = arith.constant 0.000000e+00 : f32
    %16 = vector.broadcast %cst_8 : f32 to vector<8x128xf32>
    %17 = arith.maximumf %15, %16 : vector<8x128xf32>
    %cst_9 = arith.constant dense<0.000000e+00> : vector<8x128xf32>
    %18 = tpu.matmul %17, %2, %cst_9 {dimension_numbers = #tpu.dot_dimension_numbers<[1], [0], [0], [1], [0, 0, 1, 1], [], []>} : vector<8x128xf32>, vector<128x128xf32>, vector<8x128xf32> -> vector<8x128xf32>
    %19 = vector.broadcast %6 : vector<1x128xf32> to vector<8x128xf32>
    %20 = arith.addf %18, %19 : vector<8x128xf32>
    %21 = vector.extract_strided_slice %20 {offsets = [0, 127], sizes = [8, 1], strides = [1, 1]} : vector<8x128xf32> to vector<8x1xf32>
    %22 = vector.extract_strided_slice %20 {offsets = [0, 0], sizes = [2, 128], strides = [1, 1]} : vector<8x128xf32> to vector<2x128xf32>
    %23 = vector.shape_cast %22 : vector<2x128xf32> to vector<1x2x128xf32>
    %cst_10 = arith.constant dense<0.000000e+00> : vector<1xf32>
    %24 = vector.multi_reduction <add>, %23, %cst_10 [1, 2] : vector<1x2x128xf32> to vector<1xf32>
    %25 = vector.shape_cast %24 : vector<1xf32> to vector<1x1x1xf32>
    %26 = vector.extract %25[0, 0, 0] : f32 from vector<1x1x1xf32>
    %27 = vector.extract_strided_slice %22 {offsets = [0, 127], sizes = [2, 1], strides = [1, 1]} : vector<2x128xf32> to vector<2x1xf32>
    %28 = vector.shape_cast %27 : vector<2x1xf32> to vector<1x2x1xf32>
    %cst_11 = arith.constant dense<0.000000e+00> : vector<1xf32>
    %29 = vector.multi_reduction <add>, %28, %cst_11 [1, 2] : vector<1x2x1xf32> to vector<1xf32>
    %30 = vector.shape_cast %29 : vector<1xf32> to vector<1x1x1xf32>
    %31 = vector.extract %30[0, 0, 0] : f32 from vector<1x1x1xf32>
    %32 = arith.subf %26, %31 : f32
    %cst_12 = arith.constant 1.600000e+01 : f32
    %33 = arith.divf %32, %cst_12 : f32
    %34 = vector.broadcast %21 : vector<8x1xf32> to vector<8x128xf32>
    %35 = arith.subf %34, %20 : vector<8x128xf32>
    %36 = vector.broadcast %33 : f32 to vector<8x128xf32>
    %37 = arith.addf %35, %36 : vector<8x128xf32>
    %c0_13 = arith.constant 0 : index
    %c0_14 = arith.constant 0 : index
    %38 = vector.load %arg2[%c0_13, %c0_14] : memref<8x128xf32, #tpu.memory_space<vmem>>, vector<8x128xf32>
    tpu.vector_store %arg2[%c0_13, %c0_14], %37 {strides = array<i32>} : memref<8x128xf32, #tpu.memory_space<vmem>>, vector<8x128xf32>,
    return
  }
}

</mosaic_0001>

<llo_original>
// kernel: tpu_custom_call.1
$region0: #{tpu_custom_call.1}
  #allocation0 [shape = 'u32[]', space=smem, size = 0x4, offset = 0x4, fixed_abs, tag = 'smem constant byte address 0x4 - core index']
  #allocation1 [shape = 'u32[144,128]{1,0:T(1,128)}', space=vmem, size = 0x12000, scoped, tag = 'internal scratch']
  %s0 = inlined_call_operand.hbm [shape: f32[8,16], index: 0, kind: input, shape index: {}]
  %s1 = inlined_call_operand.hbm [shape: f32[280,128], index: 1, kind: input, shape index: {}]
  %s2 = inlined_call_operand.hbm [shape: f32[8,128], index: 2, kind: output, shape index: {}]
  %s3 = sld [smem:[#allocation0]]
  $region26: #{tpu_custom_call.1} parent=0
    _
  %s5 = ssub.s32 1, %s3
  %s6 = scalar_select 0, %s5, %s3
  $region1: #{tpu_custom_call.1} parent=0
    #allocation2 [shape = 'u8[4096]{0}', space=vmem, size = 0x1000, scoped, tag = 'input window, operand 0, single buffered']
    #allocation3 [shape = 's32[1]{0}', space=sflag, size = 0x4, scoped, tag = 'scoped memory for tpu_custom_call.1']
    #allocation4 [shape = 's32[1]{0}', space=sflag, size = 0x4, scoped, tag = 'scoped memory for tpu_custom_call.1']
    #allocation5 [shape = 'u8[143360]{0}', space=vmem, size = 0x23000, scoped, tag = 'input window, operand 1, single buffered']
    #allocation6 [shape = 's32[1]{0}', space=sflag, size = 0x4, scoped, tag = 'scoped memory for tpu_custom_call.1']
    #allocation7 [shape = 'u8[4096]{0}', space=vmem, size = 0x1000, scoped, tag = 'output window, operand 0, single buffered']
    %7 = vsyncpa [#allocation3], 0
    %8 = vsyncpa [#allocation6], 0
    %9 = vsyncpa [#allocation4], 0
    // Predicated region
    $region2: #{tpu_custom_call.1} parent=1 // pred_check
      _
    $region3: #{tpu_custom_call.1} parent=1 // pred_check_branch
      %11 = sbr.rel (0) target = $region5
    $region4: #{tpu_custom_call.1} parent=1 // pred_region
      %s13 = ssub.s32 128, 128
      %14 = vsyncadd [#allocation3], %s13
      %s16 = sshll.u32 [#allocation2], 4
      %s17 = int_to_ptr.vmem [resolvable:$true] %s16
      %19 = dma.hbm_to_vmem [thread:$0]  %s0, 128, %s17, [#allocation3]
    $region5: #{tpu_custom_call.1} parent=1 // pred_fallthru
      _
    // Predicated region
    $region6: #{tpu_custom_call.1} parent=1 // pred_check
      _
    $region7: #{tpu_custom_call.1} parent=1 // pred_check_branch
      %21 = sbr.rel (0) target = $region9
    $region8: #{tpu_custom_call.1} parent=1 // pred_region
      %s23 = ssub.s32 4480, 4480
      %24 = vsyncadd [#allocation6], %s23
      %s25 = sshll.u32 [#allocation5], 4
      %s26 = int_to_ptr.vmem [resolvable:$true] %s25
      %31 = dma.hbm_to_vmem [thread:$0]  %s1, 4480, %s26, [#allocation6], 128, 128, 8
    $region9: #{tpu_custom_call.1} parent=1 // pred_fallthru
      _
    // Predicated region
    $region10: #{tpu_custom_call.1} parent=1 // pred_check
      _
    $region11: #{tpu_custom_call.1} parent=1 // pred_check_branch
      %33 = sbr.rel (0) target = $region13
    $region12: #{tpu_custom_call.1} parent=1 // pred_region
      %34 = dma.done [#allocation3], 128
    $region13: #{tpu_custom_call.1} parent=1 // pred_fallthru
      _
    // Predicated region
    $region14: #{tpu_custom_call.1} parent=1 // pred_check
      _
    $region15: #{tpu_custom_call.1} parent=1 // pred_check_branch
      %36 = sbr.rel (0) target = $region17
    $region16: #{tpu_custom_call.1} parent=1 // pred_region
      %37 = dma.done [#allocation6], 4480
    $region17: #{tpu_custom_call.1} parent=1 // pred_fallthru
      _
    %v38 = vld [vmem:[#allocation5] sm:$0xff]
    %v39 = vld [vmem:[#allocation5 + $0x8] sm:$0xff]
    %v40 = vld [vmem:[#allocation5 + $0x10] sm:$0xff]
    %v41 = vld [vmem:[#allocation5 + $0x18] sm:$0xff]
    %v42 = vld [vmem:[#allocation5 + $0x20] sm:$0xff]
    %v43 = vld [vmem:[#allocation5 + $0x28] sm:$0xff]
    %v44 = vld [vmem:[#allocation5 + $0x30] sm:$0xff]
    %v45 = vld [vmem:[#allocation5 + $0x38] sm:$0xff]
    %v46 = vld [vmem:[#allocation5 + $0x40] sm:$0xff]
    %v47 = vld [vmem:[#allocation5 + $0x48] sm:$0xff]
    %v48 = vld [vmem:[#allocation5 + $0x50] sm:$0xff]
    %v49 = vld [vmem:[#allocation5 + $0x58] sm:$0xff]
    %v50 = vld [vmem:[#allocation5 + $0x60] sm:$0xff]
    %v51 = vld [vmem:[#allocation5 + $0x68] sm:$0xff]
    %v52 = vld [vmem:[#allocation5 + $0x70] sm:$0xff]
    %v53 = vld [vmem:[#allocation5 + $0x78] sm:$0xff]
    %v54 = vld [vmem:[#allocation5 + $0x80] sm:$0xff]
    %v55 = vld [vmem:[#allocation5 + $0x88] sm:$0xff]
    %v56 = vld [vmem:[#allocation5 + $0x90] sm:$0xff]
    %v57 = vld [vmem:[#allocation5 + $0x98] sm:$0xff]
    %v58 = vld [vmem:[#allocation5 + $0xa0] sm:$0xff]
    %v59 = vld [vmem:[#allocation5 + $0xa8] sm:$0xff]
    %v60 = vld [vmem:[#allocation5 + $0xb0] sm:$0xff]
    %v61 = vld [vmem:[#allocation5 + $0xb8] sm:$0xff]
    %v62 = vld [vmem:[#allocation5 + $0xc0] sm:$0xff]
    %v63 = vld [vmem:[#allocation5 + $0xc8] sm:$0xff]
    %v64 = vld [vmem:[#allocation5 + $0xd0] sm:$0xff]
    %v65 = vld [vmem:[#allocation5 + $0xd8] sm:$0xff]
    %v66 = vld [vmem:[#allocation5 + $0xe0] sm:$0xff]
    %v67 = vld [vmem:[#allocation5 + $0xe8] sm:$0xff]
    %v68 = vld [vmem:[#allocation5 + $0xf0] sm:$0xff]
    %v69 = vld [vmem:[#allocation5 + $0xf8] sm:$0xff]
    %v70 = vld [vmem:[#allocation5 + $0x100] sm:$0xff]
    %v71 = vld [vmem:[#allocation5 + $0x108] sm:$0xff]
    %v72 = vld [vmem:[#allocation5 + $0x110] sm:$0xff]
    %v73 = vld [vmem:[#allocation2] sm:$0xff]
    %v74 = vlaneseq
    %v75 = vshrl.u32 %v74, 7
    %v76 = vsub.s32 0, %v75
    %v77 = vrot.slane %v72, %v76
    %vm78 = vcmask 130048
    %v80 = vsel %vm78, %v73, 0
    %82 = vmatprep.subr.mxu0 0.0
    %83 = vmatpush1.msra.mxu0 0.0
    %84 = vmatprep.subr.mxu0 0.0
    %85 = vmatpush1.msra.mxu0 0.0
    %86 = vmatprep.subr.mxu0 0.0
    %87 = vmatpush1.msra.mxu0 0.0
    %88 = vmatprep.subr.mxu0 0.0
    %89 = vmatpush1.msra.mxu0 0.0
    %90 = vmatprep.subr.mxu0 0.0
    %91 = vmatpush1.msra.mxu0 0.0
    %92 = vmatprep.subr.mxu0 0.0
    %93 = vmatpush1.msra.mxu0 0.0
    %94 = vmatprep.subr.mxu0 0.0
    %95 = vmatpush1.msra.mxu0 0.0
    %96 = vmatprep.subr.mxu0 0.0
    %97 = vmatpush1.msra.mxu0 0.0
    %98 = vmatprep.subr.mxu0 0.0
    %99 = vmatpush1.msra.mxu0 0.0
    %100 = vmatprep.subr.mxu0 0.0
    %101 = vmatpush1.msra.mxu0 0.0
    %102 = vmatprep.subr.mxu0 0.0
    %103 = vmatpush1.msra.mxu0 0.0
    %104 = vmatprep.subr.mxu0 0.0
    %105 = vmatpush1.msra.mxu0 0.0
    %106 = vmatprep.subr.mxu0 0.0
    %107 = vmatpush1.msra.mxu0 0.0
    %108 = vmatprep.subr.mxu0 0.0
    %109 = vmatpush1.msra.mxu0 0.0
    %110 = vmatprep.subr.mxu0 0.0
    %111 = vmatpush1.msra.mxu0 %v39
    %112 = vmatprep.subr.mxu0 0.0
    %113 = vmatpush1.msra.mxu0 %v38
    %114 = vmatprep.subr.mxu0 0.0
    %115 = vmatpush2.msra.mxu0 0.0
    %116 = vmatprep.subr.mxu0 0.0
    %117 = vmatpush2.msra.mxu0 0.0
    %118 = vmatprep.subr.mxu0 0.0
    %119 = vmatpush2.msra.mxu0 0.0
    %120 = vmatprep.subr.mxu0 0.0
    %121 = vmatpush2.msra.mxu0 0.0
    %122 = vmatprep.subr.mxu0 0.0
    %123 = vmatpush2.msra.mxu0 0.0
    %124 = vmatprep.subr.mxu0 0.0
    %125 = vmatpush2.msra.mxu0 0.0
    %126 = vmatprep.subr.mxu0 0.0
    %127 = vmatpush2.msra.mxu0 0.0
    %128 = vmatprep.subr.mxu0 0.0
    %129 = vmatpush2.msra.mxu0 0.0
    %130 = vmatprep.subr.mxu0 0.0
    %131 = vmatpush2.msra.mxu0 0.0
    %132 = vmatprep.subr.mxu0 0.0
    %133 = vmatpush2.msra.mxu0 0.0
    %134 = vmatprep.subr.mxu0 0.0
    %135 = vmatpush2.msra.mxu0 0.0
    %136 = vmatprep.subr.mxu0 0.0
    %137 = vmatpush2.msra.mxu0 0.0
    %138 = vmatprep.subr.mxu0 0.0
    %139 = vmatpush2.msra.mxu0 0.0
    %140 = vmatprep.subr.mxu0 0.0
    %141 = vmatpush2.msra.mxu0 0.0
    %142 = vmatprep.subr.mxu0 0.0
    %143 = vmatpush2.msra.mxu0 0.0
    %144 = vmatprep.subr.mxu0 0.0
    %145 = vmatpush2.msra.mxu0 0.0
    %146 = vmatprep.mubr.f32.mxu0 0.0
    %147 = vmatmul.mubr.f32.gmra.mxu0 %v80
    %v148 = vpop.f32.mrf.mxu0
    %v149 = vadd.f32 %v77, %v148
    %v150 = vpop.f32.mrf.mxu0
    %151 = vdwg.mxu0
    %v152 = vmax.f32 %v149, 0.0
    %v153 = vlaneseq
    %v154 = vshrl.u32 %v153, 7
    %v155 = vsub.s32 1, %v154
    %v156 = vrot.slane %v72, %v155
    %157 = vmatprep.subr.mxu0 0.0
    %158 = vmatpush1.msra.mxu0 %v55
    %159 = vmatprep.subr.mxu0 0.0
    %160 = vmatpush1.msra.mxu0 %v54
    %161 = vmatprep.subr.mxu0 0.0
    %162 = vmatpush1.msra.mxu0 %v53
    %163 = vmatprep.subr.mxu0 0.0
    %164 = vmatpush1.msra.mxu0 %v52
    %165 = vmatprep.subr.mxu0 0.0
    %166 = vmatpush1.msra.mxu0 %v51
    %167 = vmatprep.subr.mxu0 0.0
    %168 = vmatpush1.msra.mxu0 %v50
    %169 = vmatprep.subr.mxu0 0.0
    %170 = vmatpush1.msra.mxu0 %v49
    %171 = vmatprep.subr.mxu0 0.0
    %172 = vmatpush1.msra.mxu0 %v48
    %173 = vmatprep.subr.mxu0 0.0
    %174 = vmatpush1.msra.mxu0 %v47
    %175 = vmatprep.subr.mxu0 0.0
    %176 = vmatpush1.msra.mxu0 %v46
    %177 = vmatprep.subr.mxu0 0.0
    %178 = vmatpush1.msra.mxu0 %v45
    %179 = vmatprep.subr.mxu0 0.0
    %180 = vmatpush1.msra.mxu0 %v44
    %181 = vmatprep.subr.mxu0 0.0
    %182 = vmatpush1.msra.mxu0 %v43
    %183 = vmatprep.subr.mxu0 0.0
    %184 = vmatpush1.msra.mxu0 %v42
    %185 = vmatprep.subr.mxu0 0.0
    %186 = vmatpush1.msra.mxu0 %v41
    %187 = vmatprep.subr.mxu0 0.0
    %188 = vmatpush1.msra.mxu0 %v40
    %189 = vmatprep.subr.mxu0 0.0
    %190 = vmatpush2.msra.mxu0 0.0
    %191 = vmatprep.subr.mxu0 0.0
    %192 = vmatpush2.msra.mxu0 0.0
    %193 = vmatprep.subr.mxu0 0.0
    %194 = vmatpush2.msra.mxu0 0.0
    %195 = vmatprep.subr.mxu0 0.0
    %196 = vmatpush2.msra.mxu0 0.0
    %197 = vmatprep.subr.mxu0 0.0
    %198 = vmatpush2.msra.mxu0 0.0
    %199 = vmatprep.subr.mxu0 0.0
    %200 = vmatpush2.msra.mxu0 0.0
    %201 = vmatprep.subr.mxu0 0.0
    %202 = vmatpush2.msra.mxu0 0.0
    %203 = vmatprep.subr.mxu0 0.0
    %204 = vmatpush2.msra.mxu0 0.0
    %205 = vmatprep.subr.mxu0 0.0
    %206 = vmatpush2.msra.mxu0 0.0
    %207 = vmatprep.subr.mxu0 0.0
    %208 = vmatpush2.msra.mxu0 0.0
    %209 = vmatprep.subr.mxu0 0.0
    %210 = vmatpush2.msra.mxu0 0.0
    %211 = vmatprep.subr.mxu0 0.0
    %212 = vmatpush2.msra.mxu0 0.0
    %213 = vmatprep.subr.mxu0 0.0
    %214 = vmatpush2.msra.mxu0 0.0
    %215 = vmatprep.subr.mxu0 0.0
    %216 = vmatpush2.msra.mxu0 0.0
    %217 = vmatprep.subr.mxu0 0.0
    %218 = vmatpush2.msra.mxu0 0.0
    %219 = vmatprep.subr.mxu0 0.0
    %220 = vmatpush2.msra.mxu0 0.0
    %221 = vmatprep.mubr.f32.mxu0 0.0
    %222 = vmatmul.mubr.f32.gmra.mxu0 %v152
    %v223 = vpop.f32.mrf.mxu0
    %v224 = vadd.f32 %v156, %v223
    %v225 = vpop.f32.mrf.mxu0
    %226 = vdwg.mxu0
    %v227 = vmax.f32 %v224, 0.0
    %v228 = vlaneseq
    %v229 = vshrl.u32 %v228, 7
    %v230 = vsub.s32 2, %v229
    %v231 = vrot.slane %v72, %v230
    %232 = vmatprep.subr.mxu0 0.0
    %233 = vmatpush1.msra.mxu0 %v71
    %234 = vmatprep.subr.mxu0 0.0
    %235 = vmatpush1.msra.mxu0 %v70
    %236 = vmatprep.subr.mxu0 0.0
    %237 = vmatpush1.msra.mxu0 %v69
    %238 = vmatprep.subr.mxu0 0.0
    %239 = vmatpush1.msra.mxu0 %v68
    %240 = vmatprep.subr.mxu0 0.0
    %241 = vmatpush1.msra.mxu0 %v67
    %242 = vmatprep.subr.mxu0 0.0
    %243 = vmatpush1.msra.mxu0 %v66
    %244 = vmatprep.subr.mxu0 0.0
    %245 = vmatpush1.msra.mxu0 %v65
    %246 = vmatprep.subr.mxu0 0.0
    %247 = vmatpush1.msra.mxu0 %v64
    %248 = vmatprep.subr.mxu0 0.0
    %249 = vmatpush1.msra.mxu0 %v63
    %250 = vmatprep.subr.mxu0 0.0
    %251 = vmatpush1.msra.mxu0 %v62
    %252 = vmatprep.subr.mxu0 0.0
    %253 = vmatpush1.msra.mxu0 %v61
    %254 = vmatprep.subr.mxu0 0.0
    %255 = vmatpush1.msra.mxu0 %v60
    %256 = vmatprep.subr.mxu0 0.0
    %257 = vmatpush1.msra.mxu0 %v59
    %258 = vmatprep.subr.mxu0 0.0
    %259 = vmatpush1.msra.mxu0 %v58
    %260 = vmatprep.subr.mxu0 0.0
    %261 = vmatpush1.msra.mxu0 %v57
    %262 = vmatprep.subr.mxu0 0.0
    %263 = vmatpush1.msra.mxu0 %v56
    %264 = vmatprep.subr.mxu0 0.0
    %265 = vmatpush2.msra.mxu0 0.0
    %266 = vmatprep.subr.mxu0 0.0
    %267 = vmatpush2.msra.mxu0 0.0
    %268 = vmatprep.subr.mxu0 0.0
    %269 = vmatpush2.msra.mxu0 0.0
    %270 = vmatprep.subr.mxu0 0.0
    %271 = vmatpush2.msra.mxu0 0.0
    %272 = vmatprep.subr.mxu0 0.0
    %273 = vmatpush2.msra.mxu0 0.0
    %274 = vmatprep.subr.mxu0 0.0
    %275 = vmatpush2.msra.mxu0 0.0
    %276 = vmatprep.subr.mxu0 0.0
    %277 = vmatpush2.msra.mxu0 0.0
    %278 = vmatprep.subr.mxu0 0.0
    %279 = vmatpush2.msra.mxu0 0.0
    %280 = vmatprep.subr.mxu0 0.0
    %281 = vmatpush2.msra.mxu0 0.0
    %282 = vmatprep.subr.mxu0 0.0
    %283 = vmatpush2.msra.mxu0 0.0
    %284 = vmatprep.subr.mxu0 0.0
    %285 = vmatpush2.msra.mxu0 0.0
    %286 = vmatprep.subr.mxu0 0.0
    %287 = vmatpush2.msra.mxu0 0.0
    %288 = vmatprep.subr.mxu0 0.0
    %289 = vmatpush2.msra.mxu0 0.0
    %290 = vmatprep.subr.mxu0 0.0
    %291 = vmatpush2.msra.mxu0 0.0
    %292 = vmatprep.subr.mxu0 0.0
    %293 = vmatpush2.msra.mxu0 0.0
    %294 = vmatprep.subr.mxu0 0.0
    %295 = vmatpush2.msra.mxu0 0.0
    %296 = vmatprep.mubr.f32.mxu0 0.0
    %297 = vmatmul.mubr.f32.gmra.mxu0 %v227
    %v298 = vpop.f32.mrf.mxu0
    %v299 = vadd.f32 %v231, %v298
    %v300 = vpop.f32.mrf.mxu0
    %301 = vdwg.mxu0
    %vm302 = vcmask 1041408
    %v303 = vsel %vm302, %v299, 0.0
    %304 = vadd.xlane.f32.xlu0 %v303
    %v305 = vpop.xlane.xlu0 %304
    %v306 = vrot.slane %v305, 4
    %v307 = vadd.f32 %v305, %v306
    %v308 = vrot.slane %v307, 2
    %v309 = vadd.f32 %v307, %v308
    %v310 = vrot.slane %v309, 1
    %v311 = vadd.f32 %v309, %v310
    %s312 = vtos %v311
    %314 = vrot.lane.b32.xlu0 %v299, 1
    %v315 = vpop.permute.xlu0 %314
    %vm317 = vcmask 1024
    %v318 = vsel %vm317, %v315, 0.0
    %319 = vadd.xlane.f32.xlu0 %v318
    %v320 = vpop.xlane.xlu0 %319
    %v321 = vrot.slane %v320, 4
    %v322 = vadd.f32 %v320, %v321
    %v323 = vrot.slane %v322, 2
    %v324 = vadd.f32 %v322, %v323
    %v325 = vrot.slane %v324, 1
    %v326 = vadd.f32 %v324, %v325
    %s327 = vtos %v326
    %s328 = ssub.f32 %s312, %s327
    %v329 = vrcp.pop 16.0
    %s330 = vtos %v329
    %s331 = smul.f32 %s328, %s330
    %332 = vset.pattern.permute.xlu0 127
    %333 = vperm.xlu0 %332, %v299
    %v334 = vpop.permute.xlu0 %333
    %v336 = vsub.f32 %v334, %v299
    %v337 = vstv %s331
    %v338 = vadd.f32 %v336, %v337
    %339 = vst [vmem:[#allocation7] sm:$0xff] %v338
    // Predicated region
    $region18: #{tpu_custom_call.1} parent=1 // pred_check
      _
    $region19: #{tpu_custom_call.1} parent=1 // pred_check_branch
      %341 = sbr.rel (0) target = $region21
    $region20: #{tpu_custom_call.1} parent=1 // pred_region
      %s343 = ssub.s32 128, 128
      %344 = vsyncadd [#allocation4], %s343
      %s346 = sshll.u32 [#allocation7], 4
      %s347 = int_to_ptr.vmem [resolvable:$true] %s346
      %349 = dma.vmem_to_hbm [thread:$0]  %s347, 128, %s2, [#allocation4]
    $region21: #{tpu_custom_call.1} parent=1 // pred_fallthru
      _
    // Predicated region
    $region22: #{tpu_custom_call.1} parent=1 // pred_check
      _
    $region23: #{tpu_custom_call.1} parent=1 // pred_check_branch
      %351 = sbr.rel (0) target = $region25
    $region24: #{tpu_custom_call.1} parent=1 // pred_region
      %352 = dma.done [#allocation4], 128
    $region25: #{tpu_custom_call.1} parent=1 // pred_fallthru
      _
    %353 = vsyncpa [#allocation3], 1
    %354 = vsyncpa [#allocation6], 1
    %355 = vsyncpa [#allocation4], 1

</llo_original>
